<compile_context>
chip_gen: v7x
topology: tpu7x:2x2x1
jax: 0.10.0
libtpu: 0.0.40
codegen_flags: <defaults>
</compile_context>

<pallas_src>
import functools

import jax
import jax.numpy as jnp
from jax.experimental import pallas as pl
from jax.experimental.pallas import tpu as pltpu

LANE = 128  # lanes (batch elements) processed per inner chunk


def policy_kernel(xT_ref, w1_ref, b1_ref, w2_ref, b2_ref, out_ref,
                  z_scr, m_scr, l_scr, *, n_valid):
    """Two-phase grid. p==0: logits + running (max, sum-exp) over the batch
    (lane) axis.  p==1: normalize -> softmax over dim=0 (the batch axis)."""
    p = pl.program_id(0)          # phase
    t = pl.program_id(1)          # batch tile index
    tb = out_ref.shape[-1]        # lanes per batch tile (multiple of 128)
    n_chunks = tb // LANE

    @pl.when((p == 0) & (t == 0))
    def _init():
        m_scr[...] = jnp.full_like(m_scr, -1e30)
        l_scr[...] = jnp.zeros_like(l_scr)

    @pl.when(p == 0)
    def _logits_pass():
        w1 = w1_ref[...]          # (128, 4)  resident across all grid steps
        b1 = b1_ref[...]          # (128, 1)
        w2 = w2_ref[...]          # (2, 128)
        b2 = b2_ref[...]          # (2, 1)

        # Static 128-lane chunks: keeps the live hT at (128, 128) ~ 16 vregs.
        for c in range(n_chunks):
            off = c * LANE
            xc = xT_ref[:, off:off + LANE]                       # (4, 128)

            # fc1 + ReLU on the VPU: K=4 -> four broadcast FMAs
            # ((128,1) x (1,128) outer products) beat a padded MXU pass.
            hc = w1[:, 0:1] * xc[0:1, :]
            for k in range(1, 4):
                hc = hc + w1[:, k:k + 1] * xc[k:k + 1, :]
            hc = jnp.maximum(hc + b1, 0.0)                       # (128, 128)

            # fc2 on the MXU: full K=128 contraction, f32 accumulation.
            zc = jnp.dot(w2, hc, preferred_element_type=jnp.float32) + b2  # (2,128)

            # Mask padded batch lanes so they don't pollute the dim=0 softmax.
            lane = jax.lax.broadcasted_iota(jnp.int32, (1, LANE), 1)
            zc = jnp.where(t * tb + off + lane < n_valid, zc, -1e30)

            start = pl.multiple_of(t * tb + off, LANE)
            z_scr[:, pl.ds(start, LANE)] = zc

            # Online (max, sum-exp) accumulation — global across batch tiles.
            m_old = m_scr[...]
            m_new = jnp.maximum(m_old, jnp.max(zc, axis=-1, keepdims=True))
            l_scr[...] = (l_scr[...] * jnp.exp(m_old - m_new)
                          + jnp.sum(jnp.exp(zc - m_new), axis=-1, keepdims=True))
            m_scr[...] = m_new

    @pl.when(p == 1)
    def _normalize_pass():
        start = pl.multiple_of(t * tb, LANE)
        zt = z_scr[:, pl.ds(start, tb)]                          # (2, tb)
        # exact reciprocal so the 1e-5 f32 reference check holds (2x1 tensor).
        out_ref[...] = jnp.exp(zt - m_scr[...]) * pl.reciprocal(l_scr[...],
                                                                approx=False)


def pack_params(w1, b1, w2, b2):
    """One-time packing: weights stay in native PyTorch layouts (no per-call
    transposes); biases become columns so they broadcast along lanes."""
    return w1, b1.reshape(-1, 1), w2, b2.reshape(-1, 1)


def policy_forward(xT, packed_params, *, block_b=256):
    """xT: (4, B) float32, feature-major (batch on the lane axis).
    Returns (2, B) float32 probabilities = softmax over dim=0 (the batch)."""
    w1, b1c, w2, b2c = packed_params
    B = xT.shape[1]
    assert block_b % LANE == 0

    # Lane-align the batch axis and pick the per-grid-step block width.
    b_128 = -(-B // LANE) * LANE
    tb = min(block_b, b_128)
    n_tiles = -(-b_128 // tb)
    b_pad = n_tiles * tb

    xT_p = xT if b_pad == B else jnp.pad(xT, ((0, 0), (0, b_pad - B)))

    kernel = functools.partial(policy_kernel, n_valid=B)

    probsT = pl.pallas_call(
        kernel,
        out_shape=jax.ShapeDtypeStruct((2, b_pad), jnp.float32),
        grid_spec=pltpu.PrefetchScalarGridSpec(
            num_scalar_prefetch=0,
            grid=(2, n_tiles),                     # (phase, batch tile)
            in_specs=[
                # x tiles are only needed in phase 0; phase 1 pins block 0.
                pl.BlockSpec((4, tb), lambda p, t: (0, (1 - p) * t)),
                # Weights/biases: constant index maps -> fetched once, resident.
                pl.BlockSpec((128, 4), lambda p, t: (0, 0)),
                pl.BlockSpec((128, 1), lambda p, t: (0, 0)),
                pl.BlockSpec((2, 128), lambda p, t: (0, 0)),
                pl.BlockSpec((2, 1), lambda p, t: (0, 0)),
            ],
            # p*t: output blocks only advance (and write back) during phase 1.
            out_specs=pl.BlockSpec((2, tb), lambda p, t: (0, p * t)),
            scratch_shapes=[
                pltpu.VMEM((2, b_pad), jnp.float32),   # logits, resident
                pltpu.VMEM((2, 1), jnp.float32),       # running max
                pltpu.VMEM((2, 1), jnp.float32),       # running sum-exp
            ],
        ),
        compiler_params=pltpu.CompilerParams(
            # phase axis is ordered; tile axis carries the softmax accumulator.
            dimension_semantics=("arbitrary", "arbitrary"),
        ),
    )(xT_p, w1, b1c, w2, b2c)

    return probsT if b_pad == B else probsT[:, :B]


def init_params(key):
    """nn.Linear default init U(-1/sqrt(fan_in), 1/sqrt(fan_in)), native shapes."""
    k1, k2, k3, k4 = jax.random.split(key, 4)
    bound1 = 1.0 / jnp.sqrt(4.0)
    bound2 = 1.0 / jnp.sqrt(128.0)
    w1 = jax.random.uniform(k1, (128, 4), jnp.float32, -bound1, bound1)
    b1 = jax.random.uniform(k2, (128,), jnp.float32, -bound1, bound1)
    w2 = jax.random.uniform(k3, (2, 128), jnp.float32, -bound2, bound2)
    b2 = jax.random.uniform(k4, (2,), jnp.float32, -bound2, bound2)
    return w1, b1, w2, b2


def policy_forward_ref(x, w1, b1, w2, b2):
    h = jnp.maximum(x @ w1.T + b1, 0.0)
    logits = h @ w2.T + b2
    return jax.nn.softmax(logits, axis=0)      # dim=0, as in the PyTorch module


if __name__ == "__main__":
    key = jax.random.PRNGKey(0)
    kx, kp = jax.random.split(key)

    w1, b1, w2, b2 = init_params(kp)
    packed = pack_params(w1, b1, w2, b2)       # one-time layout packing

    # Small batch of CartPole-style states, feature-major (4, B).
    B = 8
    xT = jax.random.normal(kx, (4, B), jnp.float32)
    out = jax.block_until_ready(policy_forward(xT, packed))
    ref = policy_forward_ref(xT.T, w1, b1, w2, b2)            # (B, 2)
    assert out.shape == (2, B)
    assert jnp.allclose(out, ref.T, atol=1e-5, rtol=1e-5), (out, ref.T)
    assert jnp.allclose(jnp.sum(out, axis=1), jnp.ones((2,)), atol=1e-5)

    # Multi-tile batch: exercises the gridded lane axis, padded-lane masking,
    # and the global (cross-tile) dim=0 softmax accumulator.
    B2 = 300
    xT2 = jax.random.normal(jax.random.PRNGKey(1), (4, B2), jnp.float32)
    out2 = jax.block_until_ready(policy_forward(xT2, packed))
    ref2 = policy_forward_ref(xT2.T, w1, b1, w2, b2)
    assert out2.shape == (2, B2)
    assert jnp.allclose(out2, ref2.T, atol=1e-5, rtol=1e-5)

    print("KERNEL_OK")
</pallas_src>

<mosaic_0001>
module attributes {stable_mosaic.version = 11 : i64} {
  func.func @policy_kernel(%arg0: i32, %arg1: i32, %arg2: memref<4x128xf32, #tpu.memory_space<vmem>>, %arg3: memref<128x4xf32, #tpu.memory_space<vmem>>, %arg4: memref<128x1xf32, #tpu.memory_space<vmem>>, %arg5: memref<2x128xf32, #tpu.memory_space<vmem>>, %arg6: memref<2x1xf32, #tpu.memory_space<vmem>>, %arg7: memref<2x128xf32, #tpu.memory_space<vmem>>, %arg8: memref<2x128xf32, #tpu.memory_space<vmem>>, %arg9: memref<2x1xf32, #tpu.memory_space<vmem>>, %arg10: memref<2x1xf32, #tpu.memory_space<vmem>>) attributes {dimension_semantics = [#tpu.dimension_semantics<arbitrary>, #tpu.dimension_semantics<arbitrary>], iteration_bounds = array<i64: 2, 1>, scalar_prefetch = 0 : i64, scratch_operands = 3 : i64, tpu.core_type = #tpu.core_type<tc>, window_params = [{transform_indices = @transform_0, window_bounds = array<i64: 4, 128>}, {pipeline_mode = #tpu.pipeline_mode<synchronous>, transform_indices = @transform_1, window_bounds = array<i64: 128, 4>}, {pipeline_mode = #tpu.pipeline_mode<synchronous>, transform_indices = @transform_2, window_bounds = array<i64: 128, 1>}, {pipeline_mode = #tpu.pipeline_mode<synchronous>, transform_indices = @transform_3, window_bounds = array<i64: 2, 128>}, {pipeline_mode = #tpu.pipeline_mode<synchronous>, transform_indices = @transform_4, window_bounds = array<i64: 2, 1>}, {transform_indices = @transform_5, window_bounds = array<i64: 2, 128>}]} {
    %c0_i32 = arith.constant 0 : i32
    %0 = arith.cmpi eq, %arg0, %c0_i32 : i32
    %c0_i32_0 = arith.constant 0 : i32
    %1 = arith.cmpi eq, %arg1, %c0_i32_0 : i32
    %2 = arith.andi %0, %1 : i1
    %3 = arith.extui %2 : i1 to i32
    %c0_i32_1 = arith.constant 0 : i32
    %4 = arith.cmpi ne, %3, %c0_i32_1 : i32
    scf.if %4 {
      %cst = arith.constant -1.000000e+30 : f32
      %11 = vector.broadcast %cst : f32 to vector<2x1xf32>
      %c0 = arith.constant 0 : index
      %c0_5 = arith.constant 0 : index
      %12 = vector.load %arg9[%c0, %c0_5] : memref<2x1xf32, #tpu.memory_space<vmem>>, vector<2x1xf32>
      tpu.vector_store %arg9[%c0, %c0_5], %11 {strides = array<i32>} : memref<2x1xf32, #tpu.memory_space<vmem>>, vector<2x1xf32>,
      %cst_6 = arith.constant 0.000000e+00 : f32
      %13 = vector.broadcast %cst_6 : f32 to vector<2x1xf32>
      %c0_7 = arith.constant 0 : index
      %c0_8 = arith.constant 0 : index
      %14 = vector.load %arg10[%c0_7, %c0_8] : memref<2x1xf32, #tpu.memory_space<vmem>>, vector<2x1xf32>
      tpu.vector_store %arg10[%c0_7, %c0_8], %13 {strides = array<i32>} : memref<2x1xf32, #tpu.memory_space<vmem>>, vector<2x1xf32>,
    } else {
    }
    %c0_i32_2 = arith.constant 0 : i32
    %5 = arith.cmpi eq, %arg0, %c0_i32_2 : i32
    %6 = arith.extui %5 : i1 to i32
    %c0_i32_3 = arith.constant 0 : i32
    %7 = arith.cmpi ne, %6, %c0_i32_3 : i32
    scf.if %7 {
      %c0 = arith.constant 0 : index
      %c0_5 = arith.constant 0 : index
      %11 = vector.load %arg3[%c0, %c0_5] : memref<128x4xf32, #tpu.memory_space<vmem>>, vector<128x4xf32>
      %c0_6 = arith.constant 0 : index
      %c0_7 = arith.constant 0 : index
      %12 = vector.load %arg4[%c0_6, %c0_7] : memref<128x1xf32, #tpu.memory_space<vmem>>, vector<128x1xf32>
      %c0_8 = arith.constant 0 : index
      %c0_9 = arith.constant 0 : index
      %13 = vector.load %arg5[%c0_8, %c0_9] : memref<2x128xf32, #tpu.memory_space<vmem>>, vector<2x128xf32>
      %c0_10 = arith.constant 0 : index
      %c0_11 = arith.constant 0 : index
      %14 = vector.load %arg6[%c0_10, %c0_11] : memref<2x1xf32, #tpu.memory_space<vmem>>, vector<2x1xf32>
      %c0_12 = arith.constant 0 : index
      %c0_13 = arith.constant 0 : index
      %15 = vector.load %arg2[%c0_12, %c0_13] : memref<4x128xf32, #tpu.memory_space<vmem>>, vector<4x128xf32>
      %16 = vector.extract_strided_slice %11 {offsets = [0, 0], sizes = [128, 1], strides = [1, 1]} : vector<128x4xf32> to vector<128x1xf32>
      %17 = vector.extract_strided_slice %15 {offsets = [0, 0], sizes = [1, 128], strides = [1, 1]} : vector<4x128xf32> to vector<1x128xf32>
      %18 = vector.broadcast %16 : vector<128x1xf32> to vector<128x128xf32>
      %19 = vector.broadcast %17 : vector<1x128xf32> to vector<128x128xf32>
      %20 = arith.mulf %18, %19 : vector<128x128xf32>
      %21 = vector.extract_strided_slice %11 {offsets = [0, 1], sizes = [128, 1], strides = [1, 1]} : vector<128x4xf32> to vector<128x1xf32>
      %22 = vector.extract_strided_slice %15 {offsets = [1, 0], sizes = [1, 128], strides = [1, 1]} : vector<4x128xf32> to vector<1x128xf32>
      %23 = vector.broadcast %21 : vector<128x1xf32> to vector<128x128xf32>
      %24 = vector.broadcast %22 : vector<1x128xf32> to vector<128x128xf32>
      %25 = arith.mulf %23, %24 : vector<128x128xf32>
      %26 = arith.addf %20, %25 : vector<128x128xf32>
      %27 = vector.extract_strided_slice %11 {offsets = [0, 2], sizes = [128, 1], strides = [1, 1]} : vector<128x4xf32> to vector<128x1xf32>
      %28 = vector.extract_strided_slice %15 {offsets = [2, 0], sizes = [1, 128], strides = [1, 1]} : vector<4x128xf32> to vector<1x128xf32>
      %29 = vector.broadcast %27 : vector<128x1xf32> to vector<128x128xf32>
      %30 = vector.broadcast %28 : vector<1x128xf32> to vector<128x128xf32>
      %31 = arith.mulf %29, %30 : vector<128x128xf32>
      %32 = arith.addf %26, %31 : vector<128x128xf32>
      %33 = vector.extract_strided_slice %11 {offsets = [0, 3], sizes = [128, 1], strides = [1, 1]} : vector<128x4xf32> to vector<128x1xf32>
      %34 = vector.extract_strided_slice %15 {offsets = [3, 0], sizes = [1, 128], strides = [1, 1]} : vector<4x128xf32> to vector<1x128xf32>
      %35 = vector.broadcast %33 : vector<128x1xf32> to vector<128x128xf32>
      %36 = vector.broadcast %34 : vector<1x128xf32> to vector<128x128xf32>
      %37 = arith.mulf %35, %36 : vector<128x128xf32>
      %38 = arith.addf %32, %37 : vector<128x128xf32>
      %39 = vector.broadcast %12 : vector<128x1xf32> to vector<128x128xf32>
      %40 = arith.addf %38, %39 : vector<128x128xf32>
      %cst = arith.constant 0.000000e+00 : f32
      %41 = vector.broadcast %cst : f32 to vector<128x128xf32>
      %42 = arith.maximumf %40, %41 : vector<128x128xf32>
      %cst_14 = arith.constant dense<0.000000e+00> : vector<2x128xf32>
      %43 = tpu.matmul %13, %42, %cst_14 {dimension_numbers = #tpu.dot_dimension_numbers<[1], [0], [0], [1], [0, 0, 1, 1], [], []>} : vector<2x128xf32>, vector<128x128xf32>, vector<2x128xf32> -> vector<2x128xf32>
      %44 = vector.broadcast %14 : vector<2x1xf32> to vector<2x128xf32>
      %45 = arith.addf %43, %44 : vector<2x128xf32>
      %46 = tpu.iota {dimensions = array<i32: 1>} : vector<1x128xi32>
      %c128_i32 = arith.constant 128 : i32
      %47 = arith.muli %arg1, %c128_i32 : i32
      %c0_i32_15 = arith.constant 0 : i32
      %48 = arith.addi %47, %c0_i32_15 : i32
      %49 = vector.broadcast %48 : i32 to vector<1x128xi32>
      %50 = arith.addi %49, %46 : vector<1x128xi32>
      %c8_i32 = arith.constant 8 : i32
      %51 = vector.broadcast %c8_i32 : i32 to vector<1x128xi32>
      %52 = arith.cmpi slt, %50, %51 : vector<1x128xi32>
      %cst_16 = arith.constant -1.000000e+30 : f32
      %53 = vector.shape_cast %52 : vector<1x128xi1> to vector<1x128xi1>
      %54 = vector.broadcast %53 : vector<1x128xi1> to vector<2x128xi1>
      %55 = vector.broadcast %cst_16 : f32 to vector<2x128xf32>
      %56 = arith.select %54, %45, %55 : vector<2x128xi1>, vector<2x128xf32>
      %c128_i32_17 = arith.constant 128 : i32
      %57 = arith.muli %arg1, %c128_i32_17 : i32
      %c0_i32_18 = arith.constant 0 : i32
      %58 = arith.addi %57, %c0_i32_18 : i32
      %59 = tpu.assume_multiple %58, 128 : i32
      %c0_19 = arith.constant 0 : index
      %60 = arith.index_cast %59 : i32 to index
      %61 = vector.load %arg8[%c0_19, %60] : memref<2x128xf32, #tpu.memory_space<vmem>>, vector<2x128xf32>
      tpu.vector_store %arg8[%c0_19, %60], %56 {strides = array<i32>} : memref<2x128xf32, #tpu.memory_space<vmem>>, vector<2x128xf32>,
      %c0_20 = arith.constant 0 : index
      %c0_21 = arith.constant 0 : index
      %62 = vector.load %arg9[%c0_20, %c0_21] : memref<2x1xf32, #tpu.memory_space<vmem>>, vector<2x1xf32>
      %cst_22 = arith.constant dense<0xFF800000> : vector<2xf32>
      %63 = vector.multi_reduction <maximumf>, %56, %cst_22 [1] : vector<2x128xf32> to vector<2xf32>
      %64 = vector.shape_cast %63 : vector<2xf32> to vector<2x1xf32>
      %65 = arith.maximumf %62, %64 : vector<2x1xf32>
      %c0_23 = arith.constant 0 : index
      %c0_24 = arith.constant 0 : index
      %66 = vector.load %arg10[%c0_23, %c0_24] : memref<2x1xf32, #tpu.memory_space<vmem>>, vector<2x1xf32>
      %67 = arith.subf %62, %65 : vector<2x1xf32>
      %68 = math.exp %67 : vector<2x1xf32>
      %69 = arith.mulf %66, %68 : vector<2x1xf32>
      %70 = vector.broadcast %65 : vector<2x1xf32> to vector<2x128xf32>
      %71 = arith.subf %56, %70 : vector<2x128xf32>
      %72 = math.exp %71 : vector<2x128xf32>
      %cst_25 = arith.constant dense<0.000000e+00> : vector<2xf32>
      %73 = vector.multi_reduction <add>, %72, %cst_25 [1] : vector<2x128xf32> to vector<2xf32>
      %74 = vector.shape_cast %73 : vector<2xf32> to vector<2x1xf32>
      %75 = arith.addf %69, %74 : vector<2x1xf32>
      %c0_26 = arith.constant 0 : index
      %c0_27 = arith.constant 0 : index
      %76 = vector.load %arg10[%c0_26, %c0_27] : memref<2x1xf32, #tpu.memory_space<vmem>>, vector<2x1xf32>
      tpu.vector_store %arg10[%c0_26, %c0_27], %75 {strides = array<i32>} : memref<2x1xf32, #tpu.memory_space<vmem>>, vector<2x1xf32>,
      %c0_28 = arith.constant 0 : index
      %c0_29 = arith.constant 0 : index
      %77 = vector.load %arg9[%c0_28, %c0_29] : memref<2x1xf32, #tpu.memory_space<vmem>>, vector<2x1xf32>
      tpu.vector_store %arg9[%c0_28, %c0_29], %65 {strides = array<i32>} : memref<2x1xf32, #tpu.memory_space<vmem>>, vector<2x1xf32>,
    } else {
    }
    %c1_i32 = arith.constant 1 : i32
    %8 = arith.cmpi eq, %arg0, %c1_i32 : i32
    %9 = arith.extui %8 : i1 to i32
    %c0_i32_4 = arith.constant 0 : i32
    %10 = arith.cmpi ne, %9, %c0_i32_4 : i32
    scf.if %10 {
      %c128_i32 = arith.constant 128 : i32
      %11 = arith.muli %arg1, %c128_i32 : i32
      %12 = tpu.assume_multiple %11, 128 : i32
      %c0 = arith.constant 0 : index
      %13 = arith.index_cast %12 : i32 to index
      %14 = vector.load %arg8[%c0, %13] : memref<2x128xf32, #tpu.memory_space<vmem>>, vector<2x128xf32>
      %c0_5 = arith.constant 0 : index
      %c0_6 = arith.constant 0 : index
      %15 = vector.load %arg9[%c0_5, %c0_6] : memref<2x1xf32, #tpu.memory_space<vmem>>, vector<2x1xf32>
      %16 = vector.broadcast %15 : vector<2x1xf32> to vector<2x128xf32>
      %17 = arith.subf %14, %16 : vector<2x128xf32>
      %18 = math.exp %17 : vector<2x128xf32>
      %c0_7 = arith.constant 0 : index
      %c0_8 = arith.constant 0 : index
      %19 = vector.load %arg10[%c0_7, %c0_8] : memref<2x1xf32, #tpu.memory_space<vmem>>, vector<2x1xf32>
      %20 = tpu.reciprocal %19 : vector<2x1xf32> -> vector<2x1xf32>
      %21 = vector.broadcast %20 : vector<2x1xf32> to vector<2x128xf32>
      %22 = arith.mulf %18, %21 : vector<2x128xf32>
      %c0_9 = arith.constant 0 : index
      %c0_10 = arith.constant 0 : index
      %23 = vector.load %arg7[%c0_9, %c0_10] : memref<2x128xf32, #tpu.memory_space<vmem>>, vector<2x128xf32>
      tpu.vector_store %arg7[%c0_9, %c0_10], %22 {strides = array<i32>} : memref<2x128xf32, #tpu.memory_space<vmem>>, vector<2x128xf32>,
    } else {
    }
    return
  }
  func.func @transform_0(%arg0: i32, %arg1: i32) -> (i32, i32) {
    %c1_i32 = arith.constant 1 : i32
    %0 = arith.subi %c1_i32, %arg0 : i32
    %1 = arith.muli %0, %arg1 : i32
    %c0_i32 = arith.constant 0 : i32
    %c0_i32_0 = arith.constant 0 : i32
    return %c0_i32, %1 : i32, i32
  }
  func.func @transform_1(%arg0: i32, %arg1: i32) -> (i32, i32) {
    %c0_i32 = arith.constant 0 : i32
    %c0_i32_0 = arith.constant 0 : i32
    %c0_i32_1 = arith.constant 0 : i32
    return %c0_i32, %c0_i32_0 : i32, i32
  }
  func.func @transform_2(%arg0: i32, %arg1: i32) -> (i32, i32) {
    %c0_i32 = arith.constant 0 : i32
    %c0_i32_0 = arith.constant 0 : i32
    %c0_i32_1 = arith.constant 0 : i32
    return %c0_i32, %c0_i32_0 : i32, i32
  }
  func.func @transform_3(%arg0: i32, %arg1: i32) -> (i32, i32) {
    %c0_i32 = arith.constant 0 : i32
    %c0_i32_0 = arith.constant 0 : i32
    %c0_i32_1 = arith.constant 0 : i32
    return %c0_i32, %c0_i32_0 : i32, i32
  }
  func.func @transform_4(%arg0: i32, %arg1: i32) -> (i32, i32) {
    %c0_i32 = arith.constant 0 : i32
    %c0_i32_0 = arith.constant 0 : i32
    %c0_i32_1 = arith.constant 0 : i32
    return %c0_i32, %c0_i32_0 : i32, i32
  }
  func.func @transform_5(%arg0: i32, %arg1: i32) -> (i32, i32) {
    %0 = arith.muli %arg0, %arg1 : i32
    %c0_i32 = arith.constant 0 : i32
    %c0_i32_0 = arith.constant 0 : i32
    return %c0_i32, %0 : i32, i32
  }
}

</mosaic_0001>

<llo_original>
// kernel: tpu_custom_call.1
$region0: #{tpu_custom_call.1}
  #allocation0 [shape = 'u32[]', space=smem, size = 0x4, offset = 0x4, fixed_abs, tag = 'smem constant byte address 0x4 - core index']
  #allocation1 [shape = 'u32[144,128]{1,0:T(1,128)}', space=vmem, size = 0x12000, scoped, tag = 'internal scratch']
  #allocation2 [shape = 'f32[2,128]{1,0:T(2,128)}', space=vmem, size = 0x400, scoped, tag = 'scratch operand']
  #allocation3 [shape = 'f32[2,1]{1,0:T(2,128)}', space=vmem, size = 0x400, scoped, tag = 'scratch operand']
  #allocation4 [shape = 'f32[2,1]{1,0:T(2,128)}', space=vmem, size = 0x400, scoped, tag = 'scratch operand']
  %s0 = inlined_call_operand.vmem [shape: f32[4,128], index: 0, kind: input, shape index: {}]
  %s1 = inlined_call_operand.vmem [shape: f32[128,4], index: 1, kind: input, shape index: {}]
  %s2 = inlined_call_operand.vmem [shape: f32[128,1], index: 2, kind: input, shape index: {}]
  %s3 = inlined_call_operand.vmem [shape: f32[2,128], index: 3, kind: input, shape index: {}]
  %s4 = inlined_call_operand.vmem [shape: f32[2,1], index: 4, kind: input, shape index: {}]
  %s5 = inlined_call_operand.hbm [shape: f32[2,128], index: 5, kind: output, shape index: {}]
  %s6 = sld [smem:[#allocation0]]
  $region65: #{tpu_custom_call.1} parent=0
    _
  %s8 = ssub.s32 1, %s6
  %s9 = scalar_select 0, %s8, %s6
  $region1: #{tpu_custom_call.1} parent=0
    #allocation5 [shape = 'u8[2048]{0}', space=vmem, size = 0x800, scoped, tag = 'output window, operand 0']
    #allocation6 [shape = 's32[2]{0}', space=sflag, size = 0x8, scoped, tag = 'scoped memory for tpu_custom_call.1']
    %10 = vsyncpa [#allocation6], 0
    %s11 = scalar_lea.sflag [#allocation6], 1
    %12 = vsyncpa %s11, 0
    loop: start=0, step=1, limit=4
    $region2: #{tpu_custom_call.1} parent=1 // loop_pre_header
      _
    $region3: #{tpu_custom_call.1} parent=1 // loop_header
      %s14 = sphi 0, %s18
      %p15 = scmp.ge.s32.totalorder %s14, 4
      %s21 = sphi 0, %s33
      %s22 = sphi 0, %s29
      %s23 = sphi 0, %s21
      %s24 = sphi 0, %s22
      %s25 = sphi 0, %s23
      %s26 = sphi 0, %s24
      %s40 = sphi 0, %s42
      %s43 = sphi 0, %s40
      %s44 = sphi 0, %s43
      %s60 = sphi 0, %s44
      %s64 = sphi 0, %s64
      %s66 = sphi 0, %s64
      %s67 = sphi 0, %s66
      %s81 = sphi 0, %s67
      %s85 = sphi 0, %s85
      %s87 = sphi 0, %s85
      %s88 = sphi 0, %s87
      %s102 = sphi 0, %s88
      %s106 = sphi 0, %s106
      %s108 = sphi 0, %s106
      %s109 = sphi 0, %s108
      %s123 = sphi 0, %s109
      %s127 = sphi 0, %s127
      %s129 = sphi 0, %s127
      %s130 = sphi 0, %s129
      %s144 = sphi 0, %s130
      %s152 = sphi 0, %s154
      %s155 = sphi 0, %s152
      %s156 = sphi 0, %s155
      %s172 = sphi 0, %s156
    $region4: #{tpu_custom_call.1} parent=1 // loop_header_branch
      %17 = sbr.rel (%p15) target = $region8
    $region5: #{tpu_custom_call.1} parent=1 // loop_body
      %s19 = ssub.s32 %s14, 1
      %s20 = ssub.s32 %s14, 2
      %s27 = sadd.s32 1, %s22
      %p28 = scmp.ge.s32.totalorder %s27, 1
      %s29 = scalar_select %p28, 0, %s27
      %s30 = sadd.s32 1, %s21
      %s31 = scalar_select %p28, %s30, %s21
      %p32 = scmp.ge.s32.totalorder %s31, 2
      %s33 = scalar_select %p32, 0, %s31
      %s34 = ssub.s32 1, %s21
      %s35 = smul.u32 %s34, %s22
      %s36 = ssub.s32 1, %s33
      %s37 = smul.u32 %s36, %s29
      %s38 = ssub.s32 %s35, %s37
      %p39 = scmp.eq.s32.totalorder %s38, 0
      %s41 = sadd.s32 %s40, 1
      %s42 = scalar_select %p39, %s40, %s41
      %p45 = pneg %p39
      %p46 = scmp.eq.s32.totalorder %s14, 1
      %p47 = por %p45, %p46
      %p48 = scmp.ne.s32.totalorder %s40, %s43
      %p49 = scmp.eq.s32.totalorder %s14, 0
      %p50 = por %p48, %p49
      %p51 = scmp.ne.s32.totalorder %s40, %s43
      %p52 = scmp.eq.s32.totalorder %s19, 1
      %p53 = por %p51, %p52
      %p54 = scmp.ne.s32.totalorder %s43, %s44
      %p55 = scmp.eq.s32.totalorder %s19, 0
      %p56 = por %p54, %p55
      %p57 = scmp.ne.s32.totalorder %s43, %s44
      %p58 = scmp.eq.s32.totalorder %s20, 1
      %p59 = por %p57, %p58
      %p61 = scmp.ne.s32.totalorder %s44, %s60
      %p62 = scmp.eq.s32.totalorder %s20, 0
      %p63 = por %p61, %p62
      %s65 = sadd.s32 %s64, 1
      %p68 = scmp.eq.s32.totalorder %s14, 1
      %p69 = scmp.ne.s32.totalorder %s64, %s66
      %p70 = scmp.eq.s32.totalorder %s14, 0
      %p71 = por %p69, %p70
      %p72 = scmp.ne.s32.totalorder %s64, %s66
      %p73 = scmp.eq.s32.totalorder %s19, 1
      %p74 = por %p72, %p73
      %p75 = scmp.ne.s32.totalorder %s66, %s67
      %p76 = scmp.eq.s32.totalorder %s19, 0
      %p77 = por %p75, %p76
      %p78 = scmp.ne.s32.totalorder %s66, %s67
      %p79 = scmp.eq.s32.totalorder %s20, 1
      %p80 = por %p78, %p79
      %p82 = scmp.ne.s32.totalorder %s67, %s81
      %p83 = scmp.eq.s32.totalorder %s20, 0
      %p84 = por %p82, %p83
      %s86 = sadd.s32 %s85, 1
      %p89 = scmp.eq.s32.totalorder %s14, 1
      %p90 = scmp.ne.s32.totalorder %s85, %s87
      %p91 = scmp.eq.s32.totalorder %s14, 0
      %p92 = por %p90, %p91
      %p93 = scmp.ne.s32.totalorder %s85, %s87
      %p94 = scmp.eq.s32.totalorder %s19, 1
      %p95 = por %p93, %p94
      %p96 = scmp.ne.s32.totalorder %s87, %s88
      %p97 = scmp.eq.s32.totalorder %s19, 0
      %p98 = por %p96, %p97
      %p99 = scmp.ne.s32.totalorder %s87, %s88
      %p100 = scmp.eq.s32.totalorder %s20, 1
      %p101 = por %p99, %p100
      %p103 = scmp.ne.s32.totalorder %s88, %s102
      %p104 = scmp.eq.s32.totalorder %s20, 0
      %p105 = por %p103, %p104
      %s107 = sadd.s32 %s106, 1
      %p110 = scmp.eq.s32.totalorder %s14, 1
      %p111 = scmp.ne.s32.totalorder %s106, %s108
      %p112 = scmp.eq.s32.totalorder %s14, 0
      %p113 = por %p111, %p112
      %p114 = scmp.ne.s32.totalorder %s106, %s108
      %p115 = scmp.eq.s32.totalorder %s19, 1
      %p116 = por %p114, %p115
      %p117 = scmp.ne.s32.totalorder %s108, %s109
      %p118 = scmp.eq.s32.totalorder %s19, 0
      %p119 = por %p117, %p118
      %p120 = scmp.ne.s32.totalorder %s108, %s109
      %p121 = scmp.eq.s32.totalorder %s20, 1
      %p122 = por %p120, %p121
      %p124 = scmp.ne.s32.totalorder %s109, %s123
      %p125 = scmp.eq.s32.totalorder %s20, 0
      %p126 = por %p124, %p125
      %s128 = sadd.s32 %s127, 1
      %p131 = scmp.eq.s32.totalorder %s14, 1
      %p132 = scmp.ne.s32.totalorder %s127, %s129
      %p133 = scmp.eq.s32.totalorder %s14, 0
      %p134 = por %p132, %p133
      %p135 = scmp.ne.s32.totalorder %s127, %s129
      %p136 = scmp.eq.s32.totalorder %s19, 1
      %p137 = por %p135, %p136
      %p138 = scmp.ne.s32.totalorder %s129, %s130
      %p139 = scmp.eq.s32.totalorder %s19, 0
      %p140 = por %p138, %p139
      %p141 = scmp.ne.s32.totalorder %s129, %s130
      %p142 = scmp.eq.s32.totalorder %s20, 1
      %p143 = por %p141, %p142
      %p145 = scmp.ne.s32.totalorder %s130, %s144
      %p146 = scmp.eq.s32.totalorder %s20, 0
      %p147 = por %p145, %p146
      %s148 = smul.u32 %s21, %s22
      %s149 = smul.u32 %s33, %s29
      %s150 = ssub.s32 %s148, %s149
      %p151 = scmp.eq.s32.totalorder %s150, 0
      %s153 = sadd.s32 %s152, 1
      %s154 = scalar_select %p151, %s152, %s153
      %p157 = pneg %p151
      %p158 = scmp.eq.s32.totalorder %s14, 1
      %p159 = por %p157, %p158
      %p160 = scmp.ne.s32.totalorder %s152, %s155
      %p161 = scmp.eq.s32.totalorder %s14, 0
      %p162 = por %p160, %p161
      %p163 = scmp.ne.s32.totalorder %s152, %s155
      %p164 = scmp.eq.s32.totalorder %s19, 1
      %p165 = por %p163, %p164
      %p166 = scmp.ne.s32.totalorder %s155, %s156
      %p167 = scmp.eq.s32.totalorder %s19, 0
      %p168 = por %p166, %p167
      %p169 = scmp.ne.s32.totalorder %s155, %s156
      %p170 = scmp.eq.s32.totalorder %s20, 1
      %p171 = por %p169, %p170
      %p173 = scmp.ne.s32.totalorder %s156, %s172
      %p174 = scmp.eq.s32.totalorder %s20, 0
      %p175 = por %p173, %p174
      %p176 = scmp.le.s32.totalorder 1, %s14
      %p177 = scmp.lt.s32.totalorder %s14, 3
      %p178 = pnand %p176, %p177
      %p179 = pneg %p178
      // Predicated region
      $region9: #{tpu_custom_call.1} parent=5 // pred_check
        _
      $region10: #{tpu_custom_call.1} parent=5 // pred_check_branch
        %181 = sbr.rel (%p178) target = $region12
      $region11: #{tpu_custom_call.1} parent=5 // pred_region
        %s182 = ssub.s32 %s14, 1
        // Predicated region
        $region13: #{tpu_custom_call.1} parent=11 // pred_check
          %p183 = pneg %p77
        $region14: #{tpu_custom_call.1} parent=11 // pred_check_branch
          %185 = sbr.rel (%p183) target = $region16
        $region15: #{tpu_custom_call.1} parent=11 // pred_region
          _
        $region16: #{tpu_custom_call.1} parent=11 // pred_fallthru
          _
        // Predicated region
        $region17: #{tpu_custom_call.1} parent=11 // pred_check
          %p186 = pneg %p98
        $region18: #{tpu_custom_call.1} parent=11 // pred_check_branch
          %188 = sbr.rel (%p186) target = $region20
        $region19: #{tpu_custom_call.1} parent=11 // pred_region
          _
        $region20: #{tpu_custom_call.1} parent=11 // pred_fallthru
          _
        // Predicated region
        $region21: #{tpu_custom_call.1} parent=11 // pred_check
          %p189 = pneg %p119
        $region22: #{tpu_custom_call.1} parent=11 // pred_check_branch
          %191 = sbr.rel (%p189) target = $region24
        $region23: #{tpu_custom_call.1} parent=11 // pred_region
          _
        $region24: #{tpu_custom_call.1} parent=11 // pred_fallthru
          _
        // Predicated region
        $region25: #{tpu_custom_call.1} parent=11 // pred_check
          %p192 = pneg %p140
        $region26: #{tpu_custom_call.1} parent=11 // pred_check_branch
          %194 = sbr.rel (%p192) target = $region28
        $region27: #{tpu_custom_call.1} parent=11 // pred_region
          _
        $region28: #{tpu_custom_call.1} parent=11 // pred_fallthru
          _
      $region12: #{tpu_custom_call.1} parent=5 // pred_fallthru
        _
      %p195 = scmp.lt.s32.totalorder %s14, 2
      // Predicated region
      $region29: #{tpu_custom_call.1} parent=5 // pred_check
        %p196 = pneg %p195
      $region30: #{tpu_custom_call.1} parent=5 // pred_check_branch
        %198 = sbr.rel (%p196) target = $region32
      $region31: #{tpu_custom_call.1} parent=5 // pred_region
        // Predicated region
        $region33: #{tpu_custom_call.1} parent=31 // pred_check
          %p199 = pneg %p50
        $region34: #{tpu_custom_call.1} parent=31 // pred_check_branch
          %201 = sbr.rel (%p199) target = $region36
        $region35: #{tpu_custom_call.1} parent=31 // pred_region
          %s202 = ssub.s32 1, %s21
          %s203 = smul.u32 %s202, %s22
          %p204 = scmp.lt.s32.totalorder %s203, 0
          %s205 = scalar_select %p204, %s203, 0
          %s206 = smul.addr %s205, 4
          %s207 = scalar_lea.vmem %s0, %s206
          %s208 = ssub.s32 1, %s21
          %s209 = smul.u32 %s208, %s22
        $region36: #{tpu_custom_call.1} parent=31 // pred_fallthru
          _
      $region32: #{tpu_custom_call.1} parent=5 // pred_fallthru
        _
      %p210 = scmp.le.s32.totalorder 1, %s14
      %p211 = scmp.lt.s32.totalorder %s14, 3
      %p212 = pnand %p210, %p211
      %p213 = pneg %p212
      // Predicated region
      $region37: #{tpu_custom_call.1} parent=5 // pred_check
        _
      $region38: #{tpu_custom_call.1} parent=5 // pred_check_branch
        %215 = sbr.rel (%p212) target = $region40
      $region39: #{tpu_custom_call.1} parent=5 // pred_region
        %s216 = ssub.s32 %s14, 1
        %s217 = ssub.s32 1, %s23
        %s218 = smul.u32 %s217, %s24
        %p219 = scmp.lt.s32.totalorder %s218, 0
        %s220 = scalar_select %p219, %s218, 0
        %s221 = smul.addr %s220, 4
        %s222 = scalar_lea.vmem %s0, %s221
        %p223 = pneg %p56
        %p224 = pneg %p53
        %p225 = pneg %p77
        %p226 = pneg %p74
        %p227 = pneg %p98
        %p228 = pneg %p95
        %p229 = pneg %p119
        %p230 = pneg %p116
        %p231 = pneg %p140
        %p232 = pneg %p137
        %p233 = pneg %p168
        %p234 = pneg %p165
        %s235 = sand.u32 %s155, 1
        %s236 = scalar_lea.sflag [#allocation6], %s235
        %s237 = sand.u32 %s155, 1
        %s238 = smul.addr %s237, 2
        %s239 = scalar_lea.vmem [#allocation5], %s238
        %s240 = ssub.s32 1, %s23
        %s241 = smul.u32 %s240, %s24
        %p242 = scmp.lt.s32.totalorder %s241, 0
        %s243 = scalar_select %p242, %s241, 0
        %s244 = smul.addr %s243, 4
        %s245 = scalar_lea.vmem %s0, %s244
        %s246 = ssub.s32 1, %s23
        %s247 = smul.u32 %s246, %s24
        %s248 = smul.u32 %s23, %s24
        %p249 = scmp.eq.s32.totalorder %s23, 0
        %p250 = scmp.eq.s32.totalorder %s24, 0
        %p251 = pnand %p249, %p250
        %p252 = pneg %p251
        // Predicated region
        $region41: #{tpu_custom_call.1} parent=39 // pred_check
          _
        $region42: #{tpu_custom_call.1} parent=39 // pred_check_branch
          %254 = sbr.rel (%p251) target = $region44
        $region43: #{tpu_custom_call.1} parent=39 // pred_region
          %vm255 = vcmask 1024
          %256 = vst.msk [vmem:[#allocation3] sm:$0x3] %vm255, -1e+30
          %257 = vst.msk [vmem:[#allocation4] sm:$0x3] %vm255, 0.0
        $region44: #{tpu_custom_call.1} parent=39 // pred_fallthru
          _
        // Predicated region
        $region45: #{tpu_custom_call.1} parent=39 // pred_check
          %p258 = pneg %p249
        $region46: #{tpu_custom_call.1} parent=39 // pred_check_branch
          %260 = sbr.rel (%p258) target = $region48
        $region47: #{tpu_custom_call.1} parent=39 // pred_region
          %v261 = vld [vmem:[%s1] sm:$0xff]
          %v262 = vld [vmem:[%s1 + $0x8] sm:$0xff]
          %v263 = vld [vmem:[%s1 + $0x10] sm:$0xff]
          %v264 = vld [vmem:[%s1 + $0x18] sm:$0xff]
          %v265 = vld [vmem:[%s1 + $0x20] sm:$0xff]
          %v266 = vld [vmem:[%s1 + $0x28] sm:$0xff]
          %v267 = vld [vmem:[%s1 + $0x30] sm:$0xff]
          %v268 = vld [vmem:[%s1 + $0x38] sm:$0xff]
          %v269 = vld [vmem:[%s1 + $0x40] sm:$0xff]
          %v270 = vld [vmem:[%s1 + $0x48] sm:$0xff]
          %v271 = vld [vmem:[%s1 + $0x50] sm:$0xff]
          %v272 = vld [vmem:[%s1 + $0x58] sm:$0xff]
          %v273 = vld [vmem:[%s1 + $0x60] sm:$0xff]
          %v274 = vld [vmem:[%s1 + $0x68] sm:$0xff]
          %v275 = vld [vmem:[%s1 + $0x70] sm:$0xff]
          %v276 = vld [vmem:[%s1 + $0x78] sm:$0xff]
          %v277 = vld [vmem:[%s2] sm:$0xff]
          %v278 = vld [vmem:[%s2 + $0x8] sm:$0xff]
          %v279 = vld [vmem:[%s2 + $0x10] sm:$0xff]
          %v280 = vld [vmem:[%s2 + $0x18] sm:$0xff]
          %v281 = vld [vmem:[%s2 + $0x20] sm:$0xff]
          %v282 = vld [vmem:[%s2 + $0x28] sm:$0xff]
          %v283 = vld [vmem:[%s2 + $0x30] sm:$0xff]
          %v284 = vld [vmem:[%s2 + $0x38] sm:$0xff]
          %v285 = vld [vmem:[%s2 + $0x40] sm:$0xff]
          %v286 = vld [vmem:[%s2 + $0x48] sm:$0xff]
          %v287 = vld [vmem:[%s2 + $0x50] sm:$0xff]
          %v288 = vld [vmem:[%s2 + $0x58] sm:$0xff]
          %v289 = vld [vmem:[%s2 + $0x60] sm:$0xff]
          %v290 = vld [vmem:[%s2 + $0x68] sm:$0xff]
          %v291 = vld [vmem:[%s2 + $0x70] sm:$0xff]
          %v292 = vld [vmem:[%s2 + $0x78] sm:$0xff]
          %v293 = vld [vmem:[%s3] sm:$0x3]
          %v294 = vld [vmem:[%s4] sm:$0x3]
          %v295 = vld [vmem:[%s245] sm:$0xf]
          %297 = vset.pattern.permute.xlu0 0
          %298 = vperm.xlu0 %297, %v261
          %v299 = vpop.permute.xlu0 %298
          %302 = vset.pattern.permute.xlu0 0
          %303 = vperm.xlu0 %302, %v262
          %v304 = vpop.permute.xlu0 %303
          %307 = vset.pattern.permute.xlu0 0
          %308 = vperm.xlu0 %307, %v263
          %v309 = vpop.permute.xlu0 %308
          %312 = vset.pattern.permute.xlu0 0
          %313 = vperm.xlu0 %312, %v264
          %v314 = vpop.permute.xlu0 %313
          %317 = vset.pattern.permute.xlu0 0
          %318 = vperm.xlu0 %317, %v265
          %v319 = vpop.permute.xlu0 %318
          %322 = vset.pattern.permute.xlu0 0
          %323 = vperm.xlu0 %322, %v266
          %v324 = vpop.permute.xlu0 %323
          %327 = vset.pattern.permute.xlu0 0
          %328 = vperm.xlu0 %327, %v267
          %v329 = vpop.permute.xlu0 %328
          %332 = vset.pattern.permute.xlu0 0
          %333 = vperm.xlu0 %332, %v268
          %v334 = vpop.permute.xlu0 %333
          %337 = vset.pattern.permute.xlu0 0
          %338 = vperm.xlu0 %337, %v269
          %v339 = vpop.permute.xlu0 %338
          %342 = vset.pattern.permute.xlu0 0
          %343 = vperm.xlu0 %342, %v270
          %v344 = vpop.permute.xlu0 %343
          %347 = vset.pattern.permute.xlu0 0
          %348 = vperm.xlu0 %347, %v271
          %v349 = vpop.permute.xlu0 %348
          %352 = vset.pattern.permute.xlu0 0
          %353 = vperm.xlu0 %352, %v272
          %v354 = vpop.permute.xlu0 %353
          %357 = vset.pattern.permute.xlu0 0
          %358 = vperm.xlu0 %357, %v273
          %v359 = vpop.permute.xlu0 %358
          %362 = vset.pattern.permute.xlu0 0
          %363 = vperm.xlu0 %362, %v274
          %v364 = vpop.permute.xlu0 %363
          %367 = vset.pattern.permute.xlu0 0
          %368 = vperm.xlu0 %367, %v275
          %v369 = vpop.permute.xlu0 %368
          %372 = vset.pattern.permute.xlu0 0
          %373 = vperm.xlu0 %372, %v276
          %v374 = vpop.permute.xlu0 %373
          %v376 = vlaneseq
          %v377 = vshrl.u32 %v376, 7
          %v378 = vsub.s32 0, %v377
          %v379 = vrot.slane %v295, %v378
          %v380 = vmul.f32 %v299, %v379
          %v381 = vmul.f32 %v304, %v379
          %v382 = vmul.f32 %v309, %v379
          %v383 = vmul.f32 %v314, %v379
          %v384 = vmul.f32 %v319, %v379
          %v385 = vmul.f32 %v324, %v379
          %v386 = vmul.f32 %v329, %v379
          %v387 = vmul.f32 %v334, %v379
          %v388 = vmul.f32 %v339, %v379
          %v389 = vmul.f32 %v344, %v379
          %v390 = vmul.f32 %v349, %v379
          %v391 = vmul.f32 %v354, %v379
          %v392 = vmul.f32 %v359, %v379
          %v393 = vmul.f32 %v364, %v379
          %v394 = vmul.f32 %v369, %v379
          %v395 = vmul.f32 %v374, %v379
          %396 = vset.pattern.permute.xlu0 1
          %397 = vperm.xlu0 %396, %v261
          %v398 = vpop.permute.xlu0 %397
          %400 = vset.pattern.permute.xlu0 1
          %401 = vperm.xlu0 %400, %v262
          %v402 = vpop.permute.xlu0 %401
          %404 = vset.pattern.permute.xlu0 1
          %405 = vperm.xlu0 %404, %v263
          %v406 = vpop.permute.xlu0 %405
          %408 = vset.pattern.permute.xlu0 1
          %409 = vperm.xlu0 %408, %v264
          %v410 = vpop.permute.xlu0 %409
          %412 = vset.pattern.permute.xlu0 1
          %413 = vperm.xlu0 %412, %v265
          %v414 = vpop.permute.xlu0 %413
          %416 = vset.pattern.permute.xlu0 1
          %417 = vperm.xlu0 %416, %v266
          %v418 = vpop.permute.xlu0 %417
          %420 = vset.pattern.permute.xlu0 1
          %421 = vperm.xlu0 %420, %v267
          %v422 = vpop.permute.xlu0 %421
          %424 = vset.pattern.permute.xlu0 1
          %425 = vperm.xlu0 %424, %v268
          %v426 = vpop.permute.xlu0 %425
          %428 = vset.pattern.permute.xlu0 1
          %429 = vperm.xlu0 %428, %v269
          %v430 = vpop.permute.xlu0 %429
          %432 = vset.pattern.permute.xlu0 1
          %433 = vperm.xlu0 %432, %v270
          %v434 = vpop.permute.xlu0 %433
          %436 = vset.pattern.permute.xlu0 1
          %437 = vperm.xlu0 %436, %v271
          %v438 = vpop.permute.xlu0 %437
          %440 = vset.pattern.permute.xlu0 1
          %441 = vperm.xlu0 %440, %v272
          %v442 = vpop.permute.xlu0 %441
          %444 = vset.pattern.permute.xlu0 1
          %445 = vperm.xlu0 %444, %v273
          %v446 = vpop.permute.xlu0 %445
          %448 = vset.pattern.permute.xlu0 1
          %449 = vperm.xlu0 %448, %v274
          %v450 = vpop.permute.xlu0 %449
          %452 = vset.pattern.permute.xlu0 1
          %453 = vperm.xlu0 %452, %v275
          %v454 = vpop.permute.xlu0 %453
          %456 = vset.pattern.permute.xlu0 1
          %457 = vperm.xlu0 %456, %v276
          %v458 = vpop.permute.xlu0 %457
          %v460 = vlaneseq
          %v461 = vshrl.u32 %v460, 7
          %v462 = vsub.s32 1, %v461
          %v463 = vrot.slane %v295, %v462
          %v464 = vmul.f32 %v398, %v463
          %v465 = vmul.f32 %v402, %v463
          %v466 = vmul.f32 %v406, %v463
          %v467 = vmul.f32 %v410, %v463
          %v468 = vmul.f32 %v414, %v463
          %v469 = vmul.f32 %v418, %v463
          %v470 = vmul.f32 %v422, %v463
          %v471 = vmul.f32 %v426, %v463
          %v472 = vmul.f32 %v430, %v463
          %v473 = vmul.f32 %v434, %v463
          %v474 = vmul.f32 %v438, %v463
          %v475 = vmul.f32 %v442, %v463
          %v476 = vmul.f32 %v446, %v463
          %v477 = vmul.f32 %v450, %v463
          %v478 = vmul.f32 %v454, %v463
          %v479 = vmul.f32 %v458, %v463
          %v480 = vadd.f32 %v380, %v464
          %v481 = vadd.f32 %v381, %v465
          %v482 = vadd.f32 %v382, %v466
          %v483 = vadd.f32 %v383, %v467
          %v484 = vadd.f32 %v384, %v468
          %v485 = vadd.f32 %v385, %v469
          %v486 = vadd.f32 %v386, %v470
          %v487 = vadd.f32 %v387, %v471
          %v488 = vadd.f32 %v388, %v472
          %v489 = vadd.f32 %v389, %v473
          %v490 = vadd.f32 %v390, %v474
          %v491 = vadd.f32 %v391, %v475
          %v492 = vadd.f32 %v392, %v476
          %v493 = vadd.f32 %v393, %v477
          %v494 = vadd.f32 %v394, %v478
          %v495 = vadd.f32 %v395, %v479
          %496 = vset.pattern.permute.xlu0 2
          %497 = vperm.xlu0 %496, %v261
          %v498 = vpop.permute.xlu0 %497
          %500 = vset.pattern.permute.xlu0 2
          %501 = vperm.xlu0 %500, %v262
          %v502 = vpop.permute.xlu0 %501
          %504 = vset.pattern.permute.xlu0 2
          %505 = vperm.xlu0 %504, %v263
          %v506 = vpop.permute.xlu0 %505
          %508 = vset.pattern.permute.xlu0 2
          %509 = vperm.xlu0 %508, %v264
          %v510 = vpop.permute.xlu0 %509
          %512 = vset.pattern.permute.xlu0 2
          %513 = vperm.xlu0 %512, %v265
          %v514 = vpop.permute.xlu0 %513
          %516 = vset.pattern.permute.xlu0 2
          %517 = vperm.xlu0 %516, %v266
          %v518 = vpop.permute.xlu0 %517
          %520 = vset.pattern.permute.xlu0 2
          %521 = vperm.xlu0 %520, %v267
          %v522 = vpop.permute.xlu0 %521
          %524 = vset.pattern.permute.xlu0 2
          %525 = vperm.xlu0 %524, %v268
          %v526 = vpop.permute.xlu0 %525
          %528 = vset.pattern.permute.xlu0 2
          %529 = vperm.xlu0 %528, %v269
          %v530 = vpop.permute.xlu0 %529
          %532 = vset.pattern.permute.xlu0 2
          %533 = vperm.xlu0 %532, %v270
          %v534 = vpop.permute.xlu0 %533
          %536 = vset.pattern.permute.xlu0 2
          %537 = vperm.xlu0 %536, %v271
          %v538 = vpop.permute.xlu0 %537
          %540 = vset.pattern.permute.xlu0 2
          %541 = vperm.xlu0 %540, %v272
          %v542 = vpop.permute.xlu0 %541
          %544 = vset.pattern.permute.xlu0 2
          %545 = vperm.xlu0 %544, %v273
          %v546 = vpop.permute.xlu0 %545
          %548 = vset.pattern.permute.xlu0 2
          %549 = vperm.xlu0 %548, %v274
          %v550 = vpop.permute.xlu0 %549
          %552 = vset.pattern.permute.xlu0 2
          %553 = vperm.xlu0 %552, %v275
          %v554 = vpop.permute.xlu0 %553
          %556 = vset.pattern.permute.xlu0 2
          %557 = vperm.xlu0 %556, %v276
          %v558 = vpop.permute.xlu0 %557
          %v560 = vlaneseq
          %v561 = vshrl.u32 %v560, 7
          %v562 = vsub.s32 2, %v561
          %v563 = vrot.slane %v295, %v562
          %v564 = vmul.f32 %v498, %v563
          %v565 = vmul.f32 %v502, %v563
          %v566 = vmul.f32 %v506, %v563
          %v567 = vmul.f32 %v510, %v563
          %v568 = vmul.f32 %v514, %v563
          %v569 = vmul.f32 %v518, %v563
          %v570 = vmul.f32 %v522, %v563
          %v571 = vmul.f32 %v526, %v563
          %v572 = vmul.f32 %v530, %v563
          %v573 = vmul.f32 %v534, %v563
          %v574 = vmul.f32 %v538, %v563
          %v575 = vmul.f32 %v542, %v563
          %v576 = vmul.f32 %v546, %v563
          %v577 = vmul.f32 %v550, %v563
          %v578 = vmul.f32 %v554, %v563
          %v579 = vmul.f32 %v558, %v563
          %v580 = vadd.f32 %v480, %v564
          %v581 = vadd.f32 %v481, %v565
          %v582 = vadd.f32 %v482, %v566
          %v583 = vadd.f32 %v483, %v567
          %v584 = vadd.f32 %v484, %v568
          %v585 = vadd.f32 %v485, %v569
          %v586 = vadd.f32 %v486, %v570
          %v587 = vadd.f32 %v487, %v571
          %v588 = vadd.f32 %v488, %v572
          %v589 = vadd.f32 %v489, %v573
          %v590 = vadd.f32 %v490, %v574
          %v591 = vadd.f32 %v491, %v575
          %v592 = vadd.f32 %v492, %v576
          %v593 = vadd.f32 %v493, %v577
          %v594 = vadd.f32 %v494, %v578
          %v595 = vadd.f32 %v495, %v579
          %596 = vset.pattern.permute.xlu0 3
          %597 = vperm.xlu0 %596, %v261
          %v598 = vpop.permute.xlu0 %597
          %600 = vset.pattern.permute.xlu0 3
          %601 = vperm.xlu0 %600, %v262
          %v602 = vpop.permute.xlu0 %601
          %604 = vset.pattern.permute.xlu0 3
          %605 = vperm.xlu0 %604, %v263
          %v606 = vpop.permute.xlu0 %605
          %608 = vset.pattern.permute.xlu0 3
          %609 = vperm.xlu0 %608, %v264
          %v610 = vpop.permute.xlu0 %609
          %612 = vset.pattern.permute.xlu0 3
          %613 = vperm.xlu0 %612, %v265
          %v614 = vpop.permute.xlu0 %613
          %616 = vset.pattern.permute.xlu0 3
          %617 = vperm.xlu0 %616, %v266
          %v618 = vpop.permute.xlu0 %617
          %620 = vset.pattern.permute.xlu0 3
          %621 = vperm.xlu0 %620, %v267
          %v622 = vpop.permute.xlu0 %621
          %624 = vset.pattern.permute.xlu0 3
          %625 = vperm.xlu0 %624, %v268
          %v626 = vpop.permute.xlu0 %625
          %628 = vset.pattern.permute.xlu0 3
          %629 = vperm.xlu0 %628, %v269
          %v630 = vpop.permute.xlu0 %629
          %632 = vset.pattern.permute.xlu0 3
          %633 = vperm.xlu0 %632, %v270
          %v634 = vpop.permute.xlu0 %633
          %636 = vset.pattern.permute.xlu0 3
          %637 = vperm.xlu0 %636, %v271
          %v638 = vpop.permute.xlu0 %637
          %640 = vset.pattern.permute.xlu0 3
          %641 = vperm.xlu0 %640, %v272
          %v642 = vpop.permute.xlu0 %641
          %644 = vset.pattern.permute.xlu0 3
          %645 = vperm.xlu0 %644, %v273
          %v646 = vpop.permute.xlu0 %645
          %648 = vset.pattern.permute.xlu0 3
          %649 = vperm.xlu0 %648, %v274
          %v650 = vpop.permute.xlu0 %649
          %652 = vset.pattern.permute.xlu0 3
          %653 = vperm.xlu0 %652, %v275
          %v654 = vpop.permute.xlu0 %653
          %656 = vset.pattern.permute.xlu0 3
          %657 = vperm.xlu0 %656, %v276
          %v658 = vpop.permute.xlu0 %657
          %v660 = vlaneseq
          %v661 = vshrl.u32 %v660, 7
          %v662 = vsub.s32 3, %v661
          %v663 = vrot.slane %v295, %v662
          %v664 = vmul.f32 %v598, %v663
          %v665 = vmul.f32 %v602, %v663
          %v666 = vmul.f32 %v606, %v663
          %v667 = vmul.f32 %v610, %v663
          %v668 = vmul.f32 %v614, %v663
          %v669 = vmul.f32 %v618, %v663
          %v670 = vmul.f32 %v622, %v663
          %v671 = vmul.f32 %v626, %v663
          %v672 = vmul.f32 %v630, %v663
          %v673 = vmul.f32 %v634, %v663
          %v674 = vmul.f32 %v638, %v663
          %v675 = vmul.f32 %v642, %v663
          %v676 = vmul.f32 %v646, %v663
          %v677 = vmul.f32 %v650, %v663
          %v678 = vmul.f32 %v654, %v663
          %v679 = vmul.f32 %v658, %v663
          %v680 = vadd.f32 %v580, %v664
          %v681 = vadd.f32 %v581, %v665
          %v682 = vadd.f32 %v582, %v666
          %v683 = vadd.f32 %v583, %v667
          %v684 = vadd.f32 %v584, %v668
          %v685 = vadd.f32 %v585, %v669
          %v686 = vadd.f32 %v586, %v670
          %v687 = vadd.f32 %v587, %v671
          %v688 = vadd.f32 %v588, %v672
          %v689 = vadd.f32 %v589, %v673
          %v690 = vadd.f32 %v590, %v674
          %v691 = vadd.f32 %v591, %v675
          %v692 = vadd.f32 %v592, %v676
          %v693 = vadd.f32 %v593, %v677
          %v694 = vadd.f32 %v594, %v678
          %v695 = vadd.f32 %v595, %v679
          %697 = vset.pattern.permute.xlu0 0
          %698 = vperm.xlu0 %697, %v277
          %v699 = vpop.permute.xlu0 %698
          %702 = vset.pattern.permute.xlu0 0
          %703 = vperm.xlu0 %702, %v278
          %v704 = vpop.permute.xlu0 %703
          %707 = vset.pattern.permute.xlu0 0
          %708 = vperm.xlu0 %707, %v279
          %v709 = vpop.permute.xlu0 %708
          %712 = vset.pattern.permute.xlu0 0
          %713 = vperm.xlu0 %712, %v280
          %v714 = vpop.permute.xlu0 %713
          %717 = vset.pattern.permute.xlu0 0
          %718 = vperm.xlu0 %717, %v281
          %v719 = vpop.permute.xlu0 %718
          %722 = vset.pattern.permute.xlu0 0
          %723 = vperm.xlu0 %722, %v282
          %v724 = vpop.permute.xlu0 %723
          %727 = vset.pattern.permute.xlu0 0
          %728 = vperm.xlu0 %727, %v283
          %v729 = vpop.permute.xlu0 %728
          %732 = vset.pattern.permute.xlu0 0
          %733 = vperm.xlu0 %732, %v284
          %v734 = vpop.permute.xlu0 %733
          %737 = vset.pattern.permute.xlu0 0
          %738 = vperm.xlu0 %737, %v285
          %v739 = vpop.permute.xlu0 %738
          %742 = vset.pattern.permute.xlu0 0
          %743 = vperm.xlu0 %742, %v286
          %v744 = vpop.permute.xlu0 %743
          %747 = vset.pattern.permute.xlu0 0
          %748 = vperm.xlu0 %747, %v287
          %v749 = vpop.permute.xlu0 %748
          %752 = vset.pattern.permute.xlu0 0
          %753 = vperm.xlu0 %752, %v288
          %v754 = vpop.permute.xlu0 %753
          %757 = vset.pattern.permute.xlu0 0
          %758 = vperm.xlu0 %757, %v289
          %v759 = vpop.permute.xlu0 %758
          %762 = vset.pattern.permute.xlu0 0
          %763 = vperm.xlu0 %762, %v290
          %v764 = vpop.permute.xlu0 %763
          %767 = vset.pattern.permute.xlu0 0
          %768 = vperm.xlu0 %767, %v291
          %v769 = vpop.permute.xlu0 %768
          %772 = vset.pattern.permute.xlu0 0
          %773 = vperm.xlu0 %772, %v292
          %v774 = vpop.permute.xlu0 %773
          %v776 = vadd.f32 %v680, %v699
          %v777 = vadd.f32 %v681, %v704
          %v778 = vadd.f32 %v682, %v709
          %v779 = vadd.f32 %v683, %v714
          %v780 = vadd.f32 %v684, %v719
          %v781 = vadd.f32 %v685, %v724
          %v782 = vadd.f32 %v686, %v729
          %v783 = vadd.f32 %v687, %v734
          %v784 = vadd.f32 %v688, %v739
          %v785 = vadd.f32 %v689, %v744
          %v786 = vadd.f32 %v690, %v749
          %v787 = vadd.f32 %v691, %v754
          %v788 = vadd.f32 %v692, %v759
          %v789 = vadd.f32 %v693, %v764
          %v790 = vadd.f32 %v694, %v769
          %v791 = vadd.f32 %v695, %v774
          %v792 = vmax.f32 %v776, 0.0
          %v793 = vmax.f32 %v777, 0.0
          %v794 = vmax.f32 %v778, 0.0
          %v795 = vmax.f32 %v779, 0.0
          %v796 = vmax.f32 %v780, 0.0
          %v797 = vmax.f32 %v781, 0.0
          %v798 = vmax.f32 %v782, 0.0
          %v799 = vmax.f32 %v783, 0.0
          %v800 = vmax.f32 %v784, 0.0
          %v801 = vmax.f32 %v785, 0.0
          %v802 = vmax.f32 %v786, 0.0
          %v803 = vmax.f32 %v787, 0.0
          %v804 = vmax.f32 %v788, 0.0
          %v805 = vmax.f32 %v789, 0.0
          %v806 = vmax.f32 %v790, 0.0
          %v807 = vmax.f32 %v791, 0.0
          %809 = vset.pattern.permute.xlu0 0
          %810 = vperm.xlu0 %809, %v294
          %v811 = vpop.permute.xlu0 %810
          %813 = vmatprep.subr.mxu0 0.0
          %814 = vmatpush1.msra.mxu0 %v792
          %815 = vmatprep.subr.mxu0 0.0
          %816 = vmatpush1.msra.mxu0 %v793
          %817 = vmatprep.subr.mxu0 0.0
          %818 = vmatpush1.msra.mxu0 %v794
          %819 = vmatprep.subr.mxu0 0.0
          %820 = vmatpush1.msra.mxu0 %v795
          %821 = vmatprep.subr.mxu0 0.0
          %822 = vmatpush1.msra.mxu0 %v796
          %823 = vmatprep.subr.mxu0 0.0
          %824 = vmatpush1.msra.mxu0 %v797
          %825 = vmatprep.subr.mxu0 0.0
          %826 = vmatpush1.msra.mxu0 %v798
          %827 = vmatprep.subr.mxu0 0.0
          %828 = vmatpush1.msra.mxu0 %v799
          %829 = vmatprep.subr.mxu0 0.0
          %830 = vmatpush1.msra.mxu0 %v800
          %831 = vmatprep.subr.mxu0 0.0
          %832 = vmatpush1.msra.mxu0 %v801
          %833 = vmatprep.subr.mxu0 0.0
          %834 = vmatpush1.msra.mxu0 %v802
          %835 = vmatprep.subr.mxu0 0.0
          %836 = vmatpush1.msra.mxu0 %v803
          %837 = vmatprep.subr.mxu0 0.0
          %838 = vmatpush1.msra.mxu0 %v804
          %839 = vmatprep.subr.mxu0 0.0
          %840 = vmatpush1.msra.mxu0 %v805
          %841 = vmatprep.subr.mxu0 0.0
          %842 = vmatpush1.msra.mxu0 %v806
          %843 = vmatprep.subr.mxu0 0.0
          %844 = vmatpush1.msra.mxu0 %v807
          %845 = vmatprep.subr.mxu0 0.0
          %846 = vmatpush1.msra.mxu0 0.0
          %847 = vmatprep.subr.mxu0 0.0
          %848 = vmatpush1.msra.mxu0 0.0
          %849 = vmatprep.subr.mxu0 0.0
          %850 = vmatpush1.msra.mxu0 0.0
          %851 = vmatprep.subr.mxu0 0.0
          %852 = vmatpush1.msra.mxu0 0.0
          %853 = vmatprep.subr.mxu0 0.0
          %854 = vmatpush1.msra.mxu0 0.0
          %855 = vmatprep.subr.mxu0 0.0
          %856 = vmatpush1.msra.mxu0 0.0
          %857 = vmatprep.subr.mxu0 0.0
          %858 = vmatpush1.msra.mxu0 0.0
          %859 = vmatprep.subr.mxu0 0.0
          %860 = vmatpush1.msra.mxu0 0.0
          %861 = vmatprep.subr.mxu0 0.0
          %862 = vmatpush1.msra.mxu0 0.0
          %863 = vmatprep.subr.mxu0 0.0
          %864 = vmatpush1.msra.mxu0 0.0
          %865 = vmatprep.subr.mxu0 0.0
          %866 = vmatpush1.msra.mxu0 0.0
          %867 = vmatprep.subr.mxu0 0.0
          %868 = vmatpush1.msra.mxu0 0.0
          %869 = vmatprep.subr.mxu0 0.0
          %870 = vmatpush1.msra.mxu0 0.0
          %871 = vmatprep.subr.mxu0 0.0
          %872 = vmatpush1.msra.mxu0 0.0
          %873 = vmatprep.subr.mxu0 0.0
          %874 = vmatpush1.msra.mxu0 0.0
          %875 = vmatprep.subr.mxu0 0.0
          %876 = vmatpush1.msra.mxu0 0.0
          %877 = vmatprep.mubr.f32.mxu0 0.0
          %878 = vmatmul.mubr.f32.gmra.mrb[0].mxu0 %v293
          %v879 = vpop.f32.mrb[0].mxu0
          %v880 = vadd.f32 %v811, %v879
          %v881 = vpop.f32.mrb[0].mxu0
          %882 = vdwg.mxu0
          %v883 = vlaneseq
          %v884 = vand.u32 %v883, 127
          %s885 = smul.u32 %s24, 128
          %v886 = vstv %s885
          %v887 = vadd.s32 %v886, %v884
          %vm888 = vcmp.lt.s32.totalorder %v887, 8
          %v889 = vsel %vm888, 1, 0
          %vm890 = vcmp.eq.s32.totalorder %v889, 1
          %v891 = vsel %vm890, %v880, -1e+30
          %s892 = sshra.s32 %s885, 7
          %s893 = sand.u32 %s885, 127
          %s894 = scalar_lea.vmem [#allocation2], %s892
          %895 = vst [vmem:[%s894] sm:$0x3] %v891
          %v896 = vld [vmem:[#allocation3] sm:$0x3]
          %vm897 = vcmask 1041408
          %v898 = vsel %vm897, %v891, -inf
          %899 = vmax.xlane.f32.xlu0 %v898
          %v900 = vpop.xlane.xlu0 %899
          %v901 = vmax.f32 %v896, %v900
          %v902 = vld [vmem:[#allocation4] sm:$0x3]
          %v903 = vsub.f32 %v896, %v901
          %v904 = vmul.f32 %v903, 1.442695
          %v905 = vpow.pop %v904
          %v906 = vmul.f32 %v902, %v905
          %908 = vset.pattern.permute.xlu0 0
          %909 = vperm.xlu0 %908, %v901
          %v910 = vpop.permute.xlu0 %909
          %v912 = vsub.f32 %v891, %v910
          %v913 = vmul.f32 %v912, 1.442695
          %v914 = vpow.pop %v913
          %v915 = vsel %vm897, %v914, 0.0
          %916 = vadd.xlane.f32.xlu0 %v915
          %v917 = vpop.xlane.xlu0 %916
          %v918 = vadd.f32 %v906, %v917
          %vm919 = vcmask 1024
          %920 = vst.msk [vmem:[#allocation4] sm:$0x3] %vm919, %v918
          %921 = vst.msk [vmem:[#allocation3] sm:$0x3] %vm919, %v901
        $region48: #{tpu_custom_call.1} parent=39 // pred_fallthru
          _
        %p922 = scmp.eq.s32.totalorder %s23, 1
        // Predicated region
        $region49: #{tpu_custom_call.1} parent=39 // pred_check
          %p923 = pneg %p922
        $region50: #{tpu_custom_call.1} parent=39 // pred_check_branch
          %925 = sbr.rel (%p923) target = $region52
        $region51: #{tpu_custom_call.1} parent=39 // pred_region
          %s926 = smul.u32 %s24, 128
          %s927 = sshra.s32 %s926, 7
          %s928 = sand.u32 %s926, 127
          %s929 = scalar_lea.vmem [#allocation2], %s927
          %v930 = vld [vmem:[%s929] sm:$0x3]
          %v931 = vld [vmem:[#allocation3] sm:$0x3]
          %933 = vset.pattern.permute.xlu0 0
          %934 = vperm.xlu0 %933, %v931
          %v935 = vpop.permute.xlu0 %934
          %v937 = vsub.f32 %v930, %v935
          %v938 = vmul.f32 %v937, 1.442695
          %v939 = vpow.pop %v938
          %v940 = vld [vmem:[#allocation4] sm:$0x3]
          %v941 = vrcp.pop %v940
          %943 = vset.pattern.permute.xlu0 0
          %944 = vperm.xlu0 %943, %v941
          %v945 = vpop.permute.xlu0 %944
          %v947 = vmul.f32 %v939, %v945
          %948 = vst [vmem:[%s239] sm:$0x3] %v947
        $region52: #{tpu_custom_call.1} parent=39 // pred_fallthru
          _
        %s949 = sand.u32 %s155, 1
        %s950 = scalar_lea.sflag [#allocation6], %s949
        %s951 = sand.u32 %s155, 1
        %s952 = smul.addr %s951, 2
        %s953 = scalar_lea.vmem [#allocation5], %s952
        // Predicated region
        $region53: #{tpu_custom_call.1} parent=39 // pred_check
          %p954 = pneg %p165
        $region54: #{tpu_custom_call.1} parent=39 // pred_check_branch
          %956 = sbr.rel (%p954) target = $region56
        $region55: #{tpu_custom_call.1} parent=39 // pred_region
          %s957 = smul.u32 %s23, %s24
          %s959 = ssub.s32 32, 32
          %960 = vsyncadd %s950, %s959
          %s961 = smul.addr %s957, 32
          %s962 = scalar_lea.hbm %s5, %s961
          %s964 = sshll.u32 %s953, 4
          %s965 = int_to_ptr.vmem [resolvable:$true] %s964
          %967 = dma.vmem_to_hbm [thread:$0]  %s965, 32, %s962, %s950
        $region56: #{tpu_custom_call.1} parent=39 // pred_fallthru
          _
      $region40: #{tpu_custom_call.1} parent=5 // pred_fallthru
        _
      %p968 = scmp.le.s32.totalorder 2, %s14
      // Predicated region
      $region57: #{tpu_custom_call.1} parent=5 // pred_check
        %p969 = pneg %p968
      $region58: #{tpu_custom_call.1} parent=5 // pred_check_branch
        %971 = sbr.rel (%p969) target = $region60
      $region59: #{tpu_custom_call.1} parent=5 // pred_region
        %s972 = ssub.s32 %s14, 2
        // Predicated region
        $region61: #{tpu_custom_call.1} parent=59 // pred_check
          %p973 = pneg %p171
        $region62: #{tpu_custom_call.1} parent=59 // pred_check_branch
          %975 = sbr.rel (%p973) target = $region64
        $region63: #{tpu_custom_call.1} parent=59 // pred_region
          %s976 = sand.u32 %s156, 1
          %s977 = scalar_lea.sflag [#allocation6], %s976
          %s978 = sand.u32 %s156, 1
          %s979 = smul.addr %s978, 2
          %s980 = scalar_lea.vmem [#allocation5], %s979
          %981 = dma.done %s977, 32
        $region64: #{tpu_custom_call.1} parent=59 // pred_fallthru
          _
      $region60: #{tpu_custom_call.1} parent=5 // pred_fallthru
        _
    $region6: #{tpu_custom_call.1} parent=1 // loop_footer
      %s18 = sadd.s32 1, %s14
    $region7: #{tpu_custom_call.1} parent=1 // loop_footer_branch
      %13 = sbr.rel target = $region3
    $region8: #{tpu_custom_call.1} parent=1 // loop_exit
      _
    %982 = vsyncpa [#allocation6], 1
    %s983 = scalar_lea.sflag [#allocation6], 1
    %984 = vsyncpa %s983, 1

</llo_original>
